<compile_context>
chip_gen: v7x
topology: tpu7x:2x2x1
jax: 0.10.0
libtpu: 0.0.40
codegen_flags: <defaults>
</compile_context>

<pallas_src>
import functools
import math

import jax
import jax.numpy as jnp
import numpy as np
from jax.experimental import pallas as pl
from jax.experimental.pallas import tpu as pltpu


# -----------------------------------------------------------------------------
# Kernel 1: label-smoothing KL divergence (closed form, per-tile partial sums)
# -----------------------------------------------------------------------------
def _ls_kl_kernel(x_ref, tgt_ref, kl_ref, cnt_ref, *, padding_idx, confidence,
                  smooth_val, row_const, size):
    x = x_ref[...].astype(jnp.float32)              # (R, V) cast in-kernel
    tgt = tgt_ref[...]                              # (R, 1) int32

    ignore = tgt == padding_idx                     # also masks the padded tail
    valid = jnp.logical_not(ignore)
    tgt_eff = jnp.where(ignore, 0, tgt)

    # log-softmax statistics (logp itself is never materialised).
    m = jnp.max(x, axis=-1, keepdims=True)                      # (R, 1)
    sumexp = jnp.sum(jnp.exp(x - m), axis=-1, keepdims=True)    # (R, 1)
    lse = m + jnp.log(sumexp)                                   # (R, 1)
    sum_logp = jnp.sum(x, axis=-1, keepdims=True) - float(size) * lse

    # gather x[r, tgt[r]] via lane-iota compare + lane reduce (no vmem gather)
    col = jax.lax.broadcasted_iota(jnp.int32, x.shape, 1)
    x_tgt = jnp.sum(jnp.where(col == tgt_eff, x, 0.0), axis=-1, keepdims=True)
    logp_tgt = x_tgt - lse

    # closed-form per-row KL sum
    row_kl = (row_const
              - smooth_val * sum_logp
              - (confidence - smooth_val) * logp_tgt)           # (R, 1)
    row_kl = jnp.where(valid, row_kl, 0.0)

    kl_ref[...] = jnp.sum(row_kl, axis=0, keepdims=True)        # (1, 1)
    cnt_ref[...] = jnp.sum(valid.astype(jnp.float32), axis=0, keepdims=True)


def label_smoothing_kl_partials(x2d, tgt1d, *, padding_idx, smoothing, size,
                                row_tile=None,
                                vmem_budget_bytes=28 * 1024 * 1024):
    """Returns per-tile (kl_partial, count_partial) arrays of shape (n_tiles,1,1)."""
    n, v = x2d.shape

    if row_tile is None:
        # double-buffered native-dtype input block + ~2 f32 temporaries / elem;
        # budget also fits v7x's smaller (64 MiB) VMEM.
        per_row = v * (2 * x2d.dtype.itemsize + 8)
        row_tile = max(8, min(1024, (vmem_budget_bytes // per_row) // 8 * 8))
    row_tile = int(row_tile)

    if row_tile > n:
        row_tile = max(8, (n // 8) * 8)
    if n < row_tile:                     # only when n < 8: pad the tiny inputs
        pad = row_tile - n
        x2d = jnp.pad(x2d, ((0, pad), (0, 0)))
        tgt1d = jnp.pad(tgt1d, (0, pad), constant_values=padding_idx)
        n = row_tile

    n_tiles = pl.cdiv(n, row_tile)
    # Only the tiny int32 target vector is padded (tail rows -> padding_idx so
    # the kernel masks them); x is streamed unpadded (partial final block).
    tgt_col = jnp.pad(tgt1d, (0, n_tiles * row_tile - n),
                      constant_values=padding_idx).reshape(n_tiles * row_tile, 1)

    confidence = 1.0 - smoothing
    smooth_val = smoothing / (size - 1) if size > 1 else 0.0
    row_const = 0.0
    if confidence > 0.0:
        row_const += confidence * math.log(confidence)
    if smooth_val > 0.0:
        row_const += (size - 1) * smooth_val * math.log(smooth_val)

    kernel = functools.partial(
        _ls_kl_kernel, padding_idx=int(padding_idx), confidence=confidence,
        smooth_val=smooth_val, row_const=row_const, size=size)

    kl_parts, cnt_parts = pl.pallas_call(
        kernel,
        grid=(n_tiles,),
        in_specs=[
            pl.BlockSpec((row_tile, v), lambda i: (i, 0)),
            pl.BlockSpec((row_tile, 1), lambda i: (i, 0)),
        ],
        out_specs=(
            pl.BlockSpec((None, 1, 1), lambda i: (i, 0, 0)),
            pl.BlockSpec((None, 1, 1), lambda i: (i, 0, 0)),
        ),
        out_shape=(
            jax.ShapeDtypeStruct((n_tiles, 1, 1), jnp.float32),
            jax.ShapeDtypeStruct((n_tiles, 1, 1), jnp.float32),
        ),
        compiler_params=pltpu.CompilerParams(
            dimension_semantics=("parallel",),
            vmem_limit_bytes=48 * 1024 * 1024),
    )(x2d, tgt_col)
    return kl_parts, cnt_parts


# -----------------------------------------------------------------------------
# Kernel 2: router load-balancing loss + router z-loss, local & global fused
# -----------------------------------------------------------------------------
def _router_kernel(val_ref, idx_ref, gate_ref, load_ref, z_ref, *,
                   num_experts, num_tokens):
    vals = val_ref[0].astype(jnp.float32)           # (K, T) token-lane-dense
    idx = idx_ref[0]                                # (K, T) int32
    gl = gate_ref[0].astype(jnp.float32)            # (E, T)

    k_dim, t_dim = vals.shape
    e_iota = jax.lax.broadcasted_iota(jnp.int32, (num_experts, t_dim), 0)

    loads = jnp.zeros((num_experts, 1), jnp.float32)
    lsum = jnp.zeros((num_experts, 1), jnp.float32)
    for k in range(k_dim):                          # K (top-k) is tiny & static
        mask = idx[k:k + 1, :] == e_iota                        # (E, T)
        loads = loads + jnp.sum(mask.astype(jnp.float32), axis=1, keepdims=True)
        lsum = lsum + jnp.sum(jnp.where(mask, vals[k:k + 1, :], 0.0),
                              axis=1, keepdims=True)
    scale = float(num_experts) / float(num_tokens)
    load_ref[...] = scale * jnp.sum(loads * lsum, axis=0, keepdims=True)

    gmax = jnp.max(gl, axis=0, keepdims=True)                   # (1, T)
    lse = gmax + jnp.log(jnp.sum(jnp.exp(gl - gmax), axis=0, keepdims=True))
    z_ref[...] = jnp.sum(lse * lse, axis=1, keepdims=True) / float(num_tokens)


def router_losses_fused(router_out, *, num_experts):
    """One pallas_call for both routers.  Returns (load[2], z[2]) f32 arrays."""
    (tv_l, ti_l, gl_l), (tv_g, ti_g, gl_g) = router_out
    k = tv_l.shape[-1]
    e = gl_l.shape[-1]
    t = int(np.prod(tv_l.shape[:-1]))

    def prep(a, last):
        return a.reshape(-1, last).T                # (last, T): tokens on lanes

    vals = jnp.stack([prep(tv_l, k), prep(tv_g, k)], axis=0)              # (2,K,T)
    idx = jnp.stack([prep(ti_l, k).astype(jnp.int32),
                     prep(ti_g, k).astype(jnp.int32)], axis=0)            # (2,K,T)
    gl = jnp.stack([prep(gl_l, e), prep(gl_g, e)], axis=0)                # (2,E,T)

    kernel = functools.partial(_router_kernel, num_experts=num_experts,
                               num_tokens=t)
    load, z = pl.pallas_call(
        kernel,
        grid=(2,),
        in_specs=[
            pl.BlockSpec((1, k, t), lambda i: (i, 0, 0)),
            pl.BlockSpec((1, k, t), lambda i: (i, 0, 0)),
            pl.BlockSpec((1, e, t), lambda i: (i, 0, 0)),
        ],
        out_specs=(
            pl.BlockSpec((None, 1, 1), lambda i: (i, 0, 0)),
            pl.BlockSpec((None, 1, 1), lambda i: (i, 0, 0)),
        ),
        out_shape=(
            jax.ShapeDtypeStruct((2, 1, 1), jnp.float32),
            jax.ShapeDtypeStruct((2, 1, 1), jnp.float32),
        ),
        compiler_params=pltpu.CompilerParams(
            dimension_semantics=("parallel",)),
    )(vals, idx, gl)
    return load.reshape(2), z.reshape(2)


# -----------------------------------------------------------------------------
# Combined forward (glue in plain JAX)
# -----------------------------------------------------------------------------
def label_smoothing_loss_moe_combined(x, router_out, target, *, size,
                                      padding_idx, smoothing,
                                      normalize_length=False, num_experts=8,
                                      load_balance_loss_coef=0.0,
                                      z_loss_coeff=0.0):
    batch_size = x.shape[0]
    x2d = x.reshape(-1, size)                  # native dtype; cast happens in-kernel
    tgt1d = target.reshape(-1).astype(jnp.int32)

    kl_parts, cnt_parts = label_smoothing_kl_partials(
        x2d, tgt1d, padding_idx=padding_idx, smoothing=smoothing, size=size)
    kl_sum = jnp.sum(kl_parts)
    total = jnp.sum(cnt_parts)
    denom = total if normalize_length else jnp.float32(batch_size)
    ls_loss = kl_sum / denom

    load, z = router_losses_fused(router_out, num_experts=num_experts)
    total_loss = (ls_loss
                  + load_balance_loss_coef * (load[0] + load[1]) / 2.0
                  + z_loss_coeff * (z[0] + z[1]) / 2.0)
    return total_loss


# -----------------------------------------------------------------------------
# Pure-JAX reference (mirrors the PyTorch semantics) for a silent sanity check
# -----------------------------------------------------------------------------
def _reference_loss(x, router_out, target, *, size, padding_idx, smoothing,
                    normalize_length, num_experts, load_balance_loss_coef,
                    z_loss_coeff):
    batch = x.shape[0]
    x2 = x.reshape(-1, size).astype(jnp.float32)
    t = target.reshape(-1)
    smooth_val = smoothing / (size - 1)
    conf = 1.0 - smoothing
    ignore = t == padding_idx
    total = t.shape[0] - jnp.sum(ignore)
    t_eff = jnp.where(ignore, 0, t)
    td = jnp.full_like(x2, smooth_val).at[jnp.arange(t.shape[0]), t_eff].set(conf)
    logp = jax.nn.log_softmax(x2, axis=-1)
    kl = jnp.where(td > 0, td * jnp.log(jnp.maximum(td, 1e-38)), 0.0) - td * logp
    kl = jnp.where(ignore[:, None], 0.0, kl)
    denom = total if normalize_length else batch
    ls = jnp.sum(kl) / denom

    def rl(tv, ti, gl):
        k = tv.shape[-1]
        tt = tv.size // k
        tvf = tv.reshape(tt, k)
        tif = ti.reshape(tt, k)
        loads = jnp.array([jnp.sum(tif == e) for e in range(num_experts)],
                          jnp.float32)
        sums = jnp.array([jnp.sum(jnp.where(tif == e, tvf, 0.0))
                          for e in range(num_experts)], jnp.float32)
        load_loss = num_experts / tt * jnp.sum(loads * sums)
        lse = jax.scipy.special.logsumexp(gl, axis=-1)
        return load_loss, jnp.mean(lse ** 2)

    ll, zl = rl(*router_out[0])
    lg, zg = rl(*router_out[1])
    return (ls + load_balance_loss_coef * (ll + lg) / 2.0
            + z_loss_coeff * (zl + zg) / 2.0)


if __name__ == "__main__":
    # Module hyper-parameters (deterministic, in-script)
    size = 32
    padding_idx = -1
    smoothing = 0.1
    normalize_length = False
    num_experts = 8
    load_balance_loss_coef = 0.01
    z_loss_coeff = 0.001

    batch, seqlen, topk = 2, 8, 2

    key = jax.random.PRNGKey(0)
    k1, k2, k3, k4, k5, k6, k7, k8 = jax.random.split(key, 8)

    x = jax.random.normal(k1, (batch, seqlen, size), jnp.float32)
    target = jax.random.randint(k2, (batch, seqlen), 0, size, jnp.int32)
    # mask a few positions with padding_idx
    target = target.at[0, -2:].set(padding_idx).at[1, -1].set(padding_idx)

    gate_logits_local = jax.random.normal(k3, (batch, seqlen, num_experts),
                                          jnp.float32)
    gate_logits_global = jax.random.normal(k4, (batch, seqlen, num_experts),
                                           jnp.float32)
    topk_values_local = jax.random.uniform(k5, (batch, seqlen, topk),
                                           jnp.float32)
    topk_values_global = jax.random.uniform(k6, (batch, seqlen, topk),
                                            jnp.float32)
    topk_indices_local = jax.random.randint(k7, (batch, seqlen, topk), 0,
                                            num_experts, jnp.int32)
    topk_indices_global = jax.random.randint(k8, (batch, seqlen, topk), 0,
                                             num_experts, jnp.int32)

    router_out = (
        (topk_values_local, topk_indices_local, gate_logits_local),
        (topk_values_global, topk_indices_global, gate_logits_global),
    )

    loss = label_smoothing_loss_moe_combined(
        x, router_out, target,
        size=size, padding_idx=padding_idx, smoothing=smoothing,
        normalize_length=normalize_length, num_experts=num_experts,
        load_balance_loss_coef=load_balance_loss_coef,
        z_loss_coeff=z_loss_coeff)
    loss = jax.block_until_ready(loss)

    ref = _reference_loss(
        x, router_out, target,
        size=size, padding_idx=padding_idx, smoothing=smoothing,
        normalize_length=normalize_length, num_experts=num_experts,
        load_balance_loss_coef=load_balance_loss_coef,
        z_loss_coeff=z_loss_coeff)
    ref = jax.block_until_ready(ref)

    np.testing.assert_allclose(np.asarray(loss), np.asarray(ref),
                               rtol=1e-5, atol=1e-5)
    print("KERNEL_OK")
</pallas_src>

<mosaic_0001>
module attributes {stable_mosaic.version = 11 : i64} {
  func.func @_ls_kl_kernel(%arg0: i32, %arg1: memref<16x32xf32, #tpu.memory_space<vmem>>, %arg2: memref<16x1xi32, #tpu.memory_space<vmem>>, %arg3: memref<1x1x1xf32, #tpu.memory_space<vmem>>, %arg4: memref<1x1x1xf32, #tpu.memory_space<vmem>>) attributes {dimension_semantics = [#tpu.dimension_semantics<parallel>], iteration_bounds = array<i64: 1>, scalar_prefetch = 0 : i64, scratch_operands = 0 : i64, tpu.core_type = #tpu.core_type<tc>, window_params = [{transform_indices = @transform_0, window_bounds = array<i64: 16, 32>}, {transform_indices = @transform_1, window_bounds = array<i64: 16, 1>}, {transform_indices = @transform_2, window_bounds = array<i64: 1, 1, 1>}, {transform_indices = @transform_3, window_bounds = array<i64: 1, 1, 1>}]} {
    %c0 = arith.constant 0 : index
    %c0_0 = arith.constant 0 : index
    %0 = vector.load %arg1[%c0, %c0_0] : memref<16x32xf32, #tpu.memory_space<vmem>>, vector<16x32xf32>
    %c0_1 = arith.constant 0 : index
    %c0_2 = arith.constant 0 : index
    %1 = vector.load %arg2[%c0_1, %c0_2] : memref<16x1xi32, #tpu.memory_space<vmem>>, vector<16x1xi32>
    %c-1_i32 = arith.constant -1 : i32
    %2 = vector.broadcast %c-1_i32 : i32 to vector<16x1xi32>
    %3 = arith.cmpi eq, %1, %2 : vector<16x1xi32>
    %cst = arith.constant dense<true> : vector<16x1xi1>
    %4 = arith.xori %3, %cst : vector<16x1xi1>
    %c0_i32 = arith.constant 0 : i32
    %5 = vector.broadcast %c0_i32 : i32 to vector<16x1xi32>
    %6 = arith.select %3, %5, %1 : vector<16x1xi1>, vector<16x1xi32>
    %cst_3 = arith.constant dense<0xFF800000> : vector<16xf32>
    %7 = vector.multi_reduction <maximumf>, %0, %cst_3 [1] : vector<16x32xf32> to vector<16xf32>
    %8 = vector.shape_cast %7 : vector<16xf32> to vector<16x1xf32>
    %9 = vector.broadcast %8 : vector<16x1xf32> to vector<16x32xf32>
    %10 = arith.subf %0, %9 : vector<16x32xf32>
    %11 = math.exp %10 : vector<16x32xf32>
    %cst_4 = arith.constant dense<0.000000e+00> : vector<16xf32>
    %12 = vector.multi_reduction <add>, %11, %cst_4 [1] : vector<16x32xf32> to vector<16xf32>
    %13 = vector.shape_cast %12 : vector<16xf32> to vector<16x1xf32>
    %14 = math.log %13 : vector<16x1xf32>
    %15 = arith.addf %8, %14 : vector<16x1xf32>
    %cst_5 = arith.constant dense<0.000000e+00> : vector<16xf32>
    %16 = vector.multi_reduction <add>, %0, %cst_5 [1] : vector<16x32xf32> to vector<16xf32>
    %17 = vector.shape_cast %16 : vector<16xf32> to vector<16x1xf32>
    %cst_6 = arith.constant 3.200000e+01 : f32
    %18 = vector.broadcast %cst_6 : f32 to vector<16x1xf32>
    %19 = arith.mulf %18, %15 : vector<16x1xf32>
    %20 = arith.subf %17, %19 : vector<16x1xf32>
    %21 = tpu.iota {dimensions = array<i32: 1>} : vector<16x32xi32>
    %22 = vector.broadcast %6 : vector<16x1xi32> to vector<16x32xi32>
    %23 = arith.cmpi eq, %21, %22 : vector<16x32xi32>
    %cst_7 = arith.constant 0.000000e+00 : f32
    %24 = vector.broadcast %cst_7 : f32 to vector<16x32xf32>
    %25 = arith.select %23, %0, %24 : vector<16x32xi1>, vector<16x32xf32>
    %cst_8 = arith.constant dense<0.000000e+00> : vector<16xf32>
    %26 = vector.multi_reduction <add>, %25, %cst_8 [1] : vector<16x32xf32> to vector<16xf32>
    %27 = vector.shape_cast %26 : vector<16xf32> to vector<16x1xf32>
    %28 = arith.subf %27, %15 : vector<16x1xf32>
    %cst_9 = arith.constant 0.0032258064 : f32
    %29 = vector.broadcast %cst_9 : f32 to vector<16x1xf32>
    %30 = arith.mulf %29, %20 : vector<16x1xf32>
    %cst_10 = arith.constant -0.668481708 : f32
    %31 = vector.broadcast %cst_10 : f32 to vector<16x1xf32>
    %32 = arith.subf %31, %30 : vector<16x1xf32>
    %cst_11 = arith.constant 0.896774172 : f32
    %33 = vector.broadcast %cst_11 : f32 to vector<16x1xf32>
    %34 = arith.mulf %33, %28 : vector<16x1xf32>
    %35 = arith.subf %32, %34 : vector<16x1xf32>
    %cst_12 = arith.constant 0.000000e+00 : f32
    %36 = vector.broadcast %cst_12 : f32 to vector<16x1xf32>
    %37 = arith.select %4, %35, %36 : vector<16x1xi1>, vector<16x1xf32>
    %cst_13 = arith.constant dense<0.000000e+00> : vector<1xf32>
    %38 = vector.multi_reduction <add>, %37, %cst_13 [0] : vector<16x1xf32> to vector<1xf32>
    %39 = vector.shape_cast %38 : vector<1xf32> to vector<1x1xf32>
    %c0_14 = arith.constant 0 : index
    %c0_15 = arith.constant 0 : index
    %c0_16 = arith.constant 0 : index
    %40 = vector.load %arg3[%c0_14, %c0_15, %c0_16] : memref<1x1x1xf32, #tpu.memory_space<vmem>>, vector<1x1x1xf32>
    %41 = vector.shape_cast %40 : vector<1x1x1xf32> to vector<1x1xf32>
    %42 = vector.shape_cast %39 : vector<1x1xf32> to vector<1x1x1xf32>
    tpu.vector_store %arg3[%c0_14, %c0_15, %c0_16], %42 {strides = array<i32>} : memref<1x1x1xf32, #tpu.memory_space<vmem>>, vector<1x1x1xf32>,
    %43 = arith.extui %4 : vector<16x1xi1> to vector<16x1xi32>
    %44 = arith.sitofp %43 : vector<16x1xi32> to vector<16x1xf32>
    %cst_17 = arith.constant dense<0.000000e+00> : vector<1xf32>
    %45 = vector.multi_reduction <add>, %44, %cst_17 [0] : vector<16x1xf32> to vector<1xf32>
    %46 = vector.shape_cast %45 : vector<1xf32> to vector<1x1xf32>
    %c0_18 = arith.constant 0 : index
    %c0_19 = arith.constant 0 : index
    %c0_20 = arith.constant 0 : index
    %47 = vector.load %arg4[%c0_18, %c0_19, %c0_20] : memref<1x1x1xf32, #tpu.memory_space<vmem>>, vector<1x1x1xf32>
    %48 = vector.shape_cast %47 : vector<1x1x1xf32> to vector<1x1xf32>
    %49 = vector.shape_cast %46 : vector<1x1xf32> to vector<1x1x1xf32>
    tpu.vector_store %arg4[%c0_18, %c0_19, %c0_20], %49 {strides = array<i32>} : memref<1x1x1xf32, #tpu.memory_space<vmem>>, vector<1x1x1xf32>,
    return
  }
  func.func @transform_0(%arg0: i32) -> (i32, i32) {
    %c0_i32 = arith.constant 0 : i32
    %c0_i32_0 = arith.constant 0 : i32
    return %arg0, %c0_i32 : i32, i32
  }
  func.func @transform_1(%arg0: i32) -> (i32, i32) {
    %c0_i32 = arith.constant 0 : i32
    %c0_i32_0 = arith.constant 0 : i32
    return %arg0, %c0_i32 : i32, i32
  }
  func.func @transform_2(%arg0: i32) -> (i32, i32, i32) {
    %c0_i32 = arith.constant 0 : i32
    %c0_i32_0 = arith.constant 0 : i32
    %c0_i32_1 = arith.constant 0 : i32
    return %arg0, %c0_i32, %c0_i32_0 : i32, i32, i32
  }
  func.func @transform_3(%arg0: i32) -> (i32, i32, i32) {
    %c0_i32 = arith.constant 0 : i32
    %c0_i32_0 = arith.constant 0 : i32
    %c0_i32_1 = arith.constant 0 : i32
    return %arg0, %c0_i32, %c0_i32_0 : i32, i32, i32
  }
}

</mosaic_0001>

<llo_original>
// kernel: tpu_custom_call.1
$region0: #{tpu_custom_call.1}
  #allocation0 [shape = 'u32[]', space=smem, size = 0x4, offset = 0x4, fixed_abs, tag = 'smem constant byte address 0x4 - core index']
  #allocation1 [shape = 'u32[144,128]{1,0:T(1,128)}', space=vmem, size = 0x12000, scoped, tag = 'internal scratch']
  %s0 = inlined_call_operand.vmem [shape: f32[16,32], index: 0, kind: input, shape index: {}]
  %s1 = inlined_call_operand.vmem [shape: s32[16,1], index: 1, kind: input, shape index: {}]
  %s2 = inlined_call_operand.hbm [shape: f32[1,1,1], index: 2, kind: output, shape index: {0}]
  %s3 = inlined_call_operand.hbm [shape: f32[1,1,1], index: 3, kind: output, shape index: {1}]
  %4 = xla_tuple %s2, %s3
  %s5 = sld [smem:[#allocation0]]
  $region26: #{tpu_custom_call.1} parent=0
    _
  %s7 = ssub.s32 1, %s5
  %s8 = scalar_select 0, %s7, %s5
  $region1: #{tpu_custom_call.1} parent=0
    #allocation2 [shape = 'u8[512]{0}', space=vmem, size = 0x400, scoped, tag = 'output window, operand 0, single buffered']
    #allocation3 [shape = 's32[1]{0}', space=sflag, size = 0x4, scoped, tag = 'scoped memory for tpu_custom_call.1']
    #allocation4 [shape = 'u8[512]{0}', space=vmem, size = 0x400, scoped, tag = 'output window, operand 1, single buffered']
    #allocation5 [shape = 's32[1]{0}', space=sflag, size = 0x4, scoped, tag = 'scoped memory for tpu_custom_call.1']
    %9 = vsyncpa [#allocation3], 0
    %10 = vsyncpa [#allocation5], 0
    // Predicated region
    $region2: #{tpu_custom_call.1} parent=1 // pred_check
      _
    $region3: #{tpu_custom_call.1} parent=1 // pred_check_branch
      %12 = sbr.rel (0) target = $region5
    $region4: #{tpu_custom_call.1} parent=1 // pred_region
      _
    $region5: #{tpu_custom_call.1} parent=1 // pred_fallthru
      _
    // Predicated region
    $region6: #{tpu_custom_call.1} parent=1 // pred_check
      _
    $region7: #{tpu_custom_call.1} parent=1 // pred_check_branch
      %14 = sbr.rel (0) target = $region9
    $region8: #{tpu_custom_call.1} parent=1 // pred_region
      _
    $region9: #{tpu_custom_call.1} parent=1 // pred_fallthru
      _
    %v15 = vld [vmem:[%s0] sm:$0xff]
    %v16 = vld [vmem:[%s0 + $0x8] sm:$0xff]
    %v17 = vld [vmem:[%s1] sm:$0xff]
    %v18 = vld [vmem:[%s1 + $0x8] sm:$0xff]
    %vm19 = vcmp.eq.s32.totalorder %v17, 4294967295
    %vm20 = vcmp.eq.s32.totalorder %v18, 4294967295
    %vm21 = vmxor %vm19, 1
    %vm22 = vmxor %vm20, 1
    %v23 = vsel %vm19, 0, %v17
    %v24 = vsel %vm20, 0, %v18
    %vm25 = vcmask 261120
    %v26 = vsel %vm25, %v15, -inf
    %27 = vmax.xlane.f32.xlu0 %v26
    %v28 = vpop.xlane.xlu0 %27
    %v29 = vsel %vm25, %v16, -inf
    %30 = vmax.xlane.f32.xlu0 %v29
    %v31 = vpop.xlane.xlu0 %30
    %v32 = vsub.f32 %v15, %v28
    %v33 = vsub.f32 %v16, %v31
    %v34 = vmul.f32 %v32, 1.442695
    %v35 = vpow.pop %v34
    %v36 = vmul.f32 %v33, 1.442695
    %v37 = vpow.pop %v36
    %v38 = vsel %vm25, %v35, 0.0
    %39 = vadd.xlane.f32.xlu0 %v38
    %v40 = vpop.xlane.xlu0 %39
    %v41 = vsel %vm25, %v37, 0.0
    %42 = vadd.xlane.f32.xlu0 %v41
    %v43 = vpop.xlane.xlu0 %42
    %v44 = vlog2.pop %v40
    %v45 = vmul.f32 %v44, 0.6931472
    %v46 = vlog2.pop %v43
    %v47 = vmul.f32 %v46, 0.6931472
    %v48 = vadd.f32 %v28, %v45
    %v49 = vadd.f32 %v31, %v47
    %v50 = vsel %vm25, %v15, 0.0
    %51 = vadd.xlane.f32.xlu0 %v50
    %v52 = vpop.xlane.xlu0 %51
    %v53 = vsel %vm25, %v16, 0.0
    %54 = vadd.xlane.f32.xlu0 %v53
    %v55 = vpop.xlane.xlu0 %54
    %v56 = vmul.f32 %v48, 32.0
    %v57 = vmul.f32 %v49, 32.0
    %v58 = vsub.f32 %v52, %v56
    %v59 = vsub.f32 %v55, %v57
    %v60 = vlaneseq
    %v61 = vand.u32 %v60, 127
    %62 = vset.pattern.permute.xlu0 0
    %63 = vperm.xlu0 %62, %v23
    %v64 = vpop.permute.xlu0 %63
    %65 = vset.pattern.permute.xlu0 0
    %66 = vperm.xlu0 %65, %v24
    %v67 = vpop.permute.xlu0 %66
    %vm68 = vcmp.eq.s32.totalorder %v61, %v64
    %vm69 = vcmp.eq.s32.totalorder %v61, %v67
    %v70 = vsel %vm68, %v15, 0.0
    %v71 = vsel %vm69, %v16, 0.0
    %v72 = vsel %vm25, %v70, 0.0
    %73 = vadd.xlane.f32.xlu0 %v72
    %v74 = vpop.xlane.xlu0 %73
    %v75 = vsel %vm25, %v71, 0.0
    %76 = vadd.xlane.f32.xlu0 %v75
    %v77 = vpop.xlane.xlu0 %76
    %v78 = vsub.f32 %v74, %v48
    %v79 = vsub.f32 %v77, %v49
    %v80 = vmul.f32 %v58, 0.0032258064
    %v81 = vmul.f32 %v59, 0.0032258064
    %v82 = vsub.f32 -0.6684817, %v80
    %v83 = vsub.f32 -0.6684817, %v81
    %v84 = vmul.f32 %v78, 0.8967742
    %v85 = vmul.f32 %v79, 0.8967742
    %v86 = vsub.f32 %v82, %v84
    %v87 = vsub.f32 %v83, %v85
    %v88 = vsel %vm21, %v86, 0.0
    %v89 = vsel %vm22, %v87, 0.0
    %vm90 = vcmask 7168
    %v91 = vsel %vm90, %v88, 0.0
    %v92 = vsel %vm90, %v89, 0.0
    %v93 = vadd.f32 %v91, %v92
    %v94 = vrot.slane %v93, 4
    %v95 = vadd.f32 %v93, %v94
    %v96 = vrot.slane %v95, 2
    %v97 = vadd.f32 %v95, %v96
    %v98 = vrot.slane %v97, 1
    %v99 = vadd.f32 %v97, %v98
    %vm100 = vcmask 0
    %101 = vst.msk [vmem:[#allocation2] sm:$0x1] %vm100, %v99
    %v102 = vsel %vm21, 1, 0
    %v103 = vsel %vm22, 1, 0
    %v104 = vcvt.s32.f32 %v102
    %v105 = vcvt.s32.f32 %v103
    %v106 = vsel %vm90, %v104, 0.0
    %v107 = vsel %vm90, %v105, 0.0
    %v108 = vadd.f32 %v106, %v107
    %v109 = vrot.slane %v108, 4
    %v110 = vadd.f32 %v108, %v109
    %v111 = vrot.slane %v110, 2
    %v112 = vadd.f32 %v110, %v111
    %v113 = vrot.slane %v112, 1
    %v114 = vadd.f32 %v112, %v113
    %115 = vst.msk [vmem:[#allocation4] sm:$0x1] %vm100, %v114
    // Predicated region
    $region10: #{tpu_custom_call.1} parent=1 // pred_check
      _
    $region11: #{tpu_custom_call.1} parent=1 // pred_check_branch
      %117 = sbr.rel (0) target = $region13
    $region12: #{tpu_custom_call.1} parent=1 // pred_region
      %s119 = ssub.s32 16, 16
      %120 = vsyncadd [#allocation3], %s119
      %s122 = sshll.u32 [#allocation2], 4
      %s123 = int_to_ptr.vmem [resolvable:$true] %s122
      %125 = dma.vmem_to_hbm [thread:$0]  %s123, 16, %s2, [#allocation3]
    $region13: #{tpu_custom_call.1} parent=1 // pred_fallthru
      _
    // Predicated region
    $region14: #{tpu_custom_call.1} parent=1 // pred_check
      _
    $region15: #{tpu_custom_call.1} parent=1 // pred_check_branch
      %127 = sbr.rel (0) target = $region17
    $region16: #{tpu_custom_call.1} parent=1 // pred_region
      %s129 = ssub.s32 16, 16
      %130 = vsyncadd [#allocation5], %s129
      %s132 = sshll.u32 [#allocation4], 4
      %s133 = int_to_ptr.vmem [resolvable:$true] %s132
      %135 = dma.vmem_to_hbm [thread:$0]  %s133, 16, %s3, [#allocation5]
    $region17: #{tpu_custom_call.1} parent=1 // pred_fallthru
      _
    // Predicated region
    $region18: #{tpu_custom_call.1} parent=1 // pred_check
      _
    $region19: #{tpu_custom_call.1} parent=1 // pred_check_branch
      %137 = sbr.rel (0) target = $region21
    $region20: #{tpu_custom_call.1} parent=1 // pred_region
      %138 = dma.done [#allocation3], 16
    $region21: #{tpu_custom_call.1} parent=1 // pred_fallthru
      _
    // Predicated region
    $region22: #{tpu_custom_call.1} parent=1 // pred_check
      _
    $region23: #{tpu_custom_call.1} parent=1 // pred_check_branch
      %140 = sbr.rel (0) target = $region25
    $region24: #{tpu_custom_call.1} parent=1 // pred_region
      %141 = dma.done [#allocation5], 16
    $region25: #{tpu_custom_call.1} parent=1 // pred_fallthru
      _
    %142 = vsyncpa [#allocation3], 1
    %143 = vsyncpa [#allocation5], 1

</llo_original>
